<compile_context>
chip_gen: v7x
topology: tpu7x:2x2x1
jax: 0.10.0
libtpu: 0.0.40
codegen_flags: <defaults>
</compile_context>

<pallas_src>
import functools

import jax
import jax.numpy as jnp
from jax.experimental import pallas as pl
from jax.experimental.pallas import tpu as pltpu


def _weighted_state_loss_kernel(pred_ref, targ_ref, w_ref, out_ref, *,
                                rows_per_block, total_rows):
    """One grid step: weighted squared-error partial sum for a block of rows."""
    p = pred_ref[...].astype(jnp.float32)          # (Rb, L)
    t = targ_ref[...].astype(jnp.float32)          # (Rb, L)
    d = p - t
    d2 = d * d

    # Mask rows of a (possibly partial) last block.  Static check: this code
    # is only emitted when the row count does not divide evenly into blocks.
    # The mask must stay applied BEFORE any reduction.
    if total_rows % rows_per_block != 0:
        g = pl.program_id(0)
        row_ids = (jax.lax.broadcasted_iota(jnp.int32, d2.shape, 0)
                   + g * rows_per_block)
        d2 = jnp.where(row_ids < total_rows, d2, 0.0)

    # Row-first reduction, then a single weight multiply per lane column
    # (weights are a resident (1, L) f32 row; no per-row broadcast multiply).
    col = jnp.sum(d2, axis=0, keepdims=True)       # (1, L)
    s = jnp.sum(col * w_ref[...])

    # Lane-dense, (8,128)-compliant output block; wrapper reads lane 0.
    out_ref[...] = jnp.full(out_ref.shape, s, dtype=out_ref.dtype)


def _sublane_multiple(dtype):
    """Dtype-native sublane packing multiple: 8 (f32), 16 (bf16), 32 (int8/fp8)."""
    return max(8, 32 // max(1, jnp.dtype(dtype).itemsize))


def _vmem_capacity_bytes():
    """Per-core VMEM capacity; conservative 64 MiB fallback (v7x-sized)."""
    try:
        info = pltpu.get_tpu_info()
        return int(getattr(info, "vmem_capacity_bytes", 64 << 20))
    except Exception:
        return 64 << 20


def _pick_rows_per_block(rows, lane_width, itemsize, sub_mult,
                         target_block_bytes, min_blocks=2):
    """Largest legal row count per block near target_block_bytes per input,
    capped so the grid has >= min_blocks steps (v7x megacore) when possible."""
    row_bytes = max(1, lane_width * itemsize)
    rb = max(1, target_block_bytes // row_bytes)
    if rows >= min_blocks * sub_mult:
        # Guarantee at least `min_blocks` grid steps so both TensorCores
        # on v7x get work; costs at most one extra ~0.35 us step elsewhere.
        rb = min(rb, max(sub_mult, rows // min_blocks))
    if rb >= rows:
        return rows                                # full array dim -> always legal
    rb = max(sub_mult, (rb // sub_mult) * sub_mult)
    return min(rb, rows)


def _pick_lane_fold(batch, ht, lane_target=1024, max_fold=64):
    """Smallest divisor k of `batch` with k*ht >= lane_target (lane density)."""
    if ht >= 512:
        return 1
    best = 1
    for cand in range(1, min(batch, max_fold) + 1):
        if batch % cand == 0:
            best = cand
            if cand * ht >= lane_target:
                break
    return best


def weighted_state_loss(pred, targ, weights):
    """Pallas implementation of WeightedStateLoss (L2 variant) forward."""
    B, H, T = pred.shape
    assert targ.shape == (B, H, T)
    assert weights.shape == (H, T)

    HT = H * T
    itemsize = jnp.dtype(pred.dtype).itemsize

    # Lane-density re-chunk: fold k consecutive batch rows into the lane axis
    # when H*T is narrow, tiling the (tiny) weights row k times to match.
    k = _pick_lane_fold(B, HT)
    R = B // k                                      # rows after folding
    L = k * HT                                      # lane width after folding

    pred2 = pred.reshape(R, L)
    targ2 = targ.reshape(R, L)
    w_row = weights.astype(jnp.float32).reshape(1, HT)
    w2 = jnp.tile(w_row, (1, k)) if k > 1 else w_row    # (1, L), resident f32

    # Generation-aware block sizing: ~16 MiB/input on 128 MiB-VMEM chips
    # (v5e/v6e), ~8 MiB on 64 MiB-VMEM chips (v7x).
    vmem_cap = _vmem_capacity_bytes()
    target_block_bytes = min(16 << 20, vmem_cap // 8)

    sub_mult = _sublane_multiple(pred.dtype)
    rb = _pick_rows_per_block(R, L, itemsize, sub_mult, target_block_bytes)
    grid = pl.cdiv(R, rb)

    # VMEM footprint: 2 inputs x 2 pipeline buffers x block + weights + out.
    block_in_bytes = rb * L * itemsize
    footprint = 4 * block_in_bytes + 2 * L * 4 + grid * 512 + (1 << 20)
    vmem_limit = int(min(int(vmem_cap * 0.9),
                         max(32 << 20, footprint + (8 << 20))))

    inv_total = 1.0 / float(B * H * T)

    kernel = functools.partial(_weighted_state_loss_kernel,
                               rows_per_block=rb, total_rows=R)

    cost = pl.CostEstimate(
        flops=int(3 * R * L),
        transcendentals=0,
        bytes_accessed=int(2 * R * L * itemsize + L * 4 + grid * 512),
    )

    partials = pl.pallas_call(
        kernel,
        out_shape=jax.ShapeDtypeStruct((grid, 1, 128), jnp.float32),
        grid_spec=pltpu.PrefetchScalarGridSpec(
            num_scalar_prefetch=0,
            grid=(grid,),
            in_specs=[
                pl.BlockSpec((rb, L), lambda g: (g, 0)),     # pred rows
                pl.BlockSpec((rb, L), lambda g: (g, 0)),     # targ rows
                pl.BlockSpec((1, L), lambda g: (0, 0)),      # weights (resident)
            ],
            out_specs=pl.BlockSpec((1, 1, 128), lambda g: (g, 0, 0)),
        ),
        compiler_params=pltpu.CompilerParams(
            # Each block is independent -> shard across TensorCores on v7x.
            dimension_semantics=("parallel",),
            vmem_limit_bytes=vmem_limit,
        ),
        cost_estimate=cost,
    )(pred2, targ2, w2)

    # Tiny epilogue in XLA: sum the per-block partials, apply the mean scale.
    weighted_loss = jnp.sum(partials[:, 0, 0]) * inv_total
    return weighted_loss, {"a0_loss": weighted_loss}


if __name__ == "__main__":
    # Small shapes consistent with [batch x horizon x transition_dim].
    B, H, T = 4, 8, 32

    key = jax.random.PRNGKey(0)
    k_pred, k_targ = jax.random.split(key)
    pred = jax.random.normal(k_pred, (B, H, T), dtype=jnp.float32)
    targ = jax.random.normal(k_targ, (B, H, T), dtype=jnp.float32)

    # Deterministic weights buffer (the module registers `weights` in __init__);
    # diffuser uses a per-(horizon, transition_dim) discount-style weighting.
    discounts = 0.99 ** jnp.arange(H, dtype=jnp.float32)           # [H]
    weights = jnp.broadcast_to(discounts[:, None], (H, T)).copy()  # [H, T]

    loss, info = weighted_state_loss(pred, targ, weights)
    jax.block_until_ready(loss)

    # Cross-check against plain-JAX reference.
    ref = jnp.mean(((pred - targ) ** 2) * weights[None])
    assert jnp.allclose(loss, ref, rtol=1e-5, atol=1e-6), (loss, ref)
    assert jnp.allclose(info["a0_loss"], ref, rtol=1e-5, atol=1e-6)

    print("KERNEL_OK")
</pallas_src>

<mosaic_0001>
module attributes {stable_mosaic.version = 11 : i64} {
  func.func @_weighted_state_loss_kernel(%arg0: i32, %arg1: memref<1x1024xf32, #tpu.memory_space<vmem>>, %arg2: memref<1x1024xf32, #tpu.memory_space<vmem>>, %arg3: memref<1x1024xf32, #tpu.memory_space<vmem>>, %arg4: memref<1x1x128xf32, #tpu.memory_space<vmem>>) attributes {dimension_semantics = [#tpu.dimension_semantics<parallel>], iteration_bounds = array<i64: 1>, scalar_prefetch = 0 : i64, scratch_operands = 0 : i64, tpu.core_type = #tpu.core_type<tc>, window_params = [{transform_indices = @transform_0, window_bounds = array<i64: 1, 1024>}, {transform_indices = @transform_1, window_bounds = array<i64: 1, 1024>}, {pipeline_mode = #tpu.pipeline_mode<synchronous>, transform_indices = @transform_2, window_bounds = array<i64: 1, 1024>}, {transform_indices = @transform_3, window_bounds = array<i64: 1, 1, 128>}]} {
    %c0 = arith.constant 0 : index
    %c0_0 = arith.constant 0 : index
    %0 = vector.load %arg1[%c0, %c0_0] : memref<1x1024xf32, #tpu.memory_space<vmem>>, vector<1x1024xf32>
    %c0_1 = arith.constant 0 : index
    %c0_2 = arith.constant 0 : index
    %1 = vector.load %arg2[%c0_1, %c0_2] : memref<1x1024xf32, #tpu.memory_space<vmem>>, vector<1x1024xf32>
    %2 = arith.subf %0, %1 : vector<1x1024xf32>
    %3 = arith.mulf %2, %2 : vector<1x1024xf32>
    %cst = arith.constant dense<0.000000e+00> : vector<1024xf32>
    %4 = vector.multi_reduction <add>, %3, %cst [0] : vector<1x1024xf32> to vector<1024xf32>
    %5 = vector.shape_cast %4 : vector<1024xf32> to vector<1x1024xf32>
    %c0_3 = arith.constant 0 : index
    %c0_4 = arith.constant 0 : index
    %6 = vector.load %arg3[%c0_3, %c0_4] : memref<1x1024xf32, #tpu.memory_space<vmem>>, vector<1x1024xf32>
    %7 = arith.mulf %5, %6 : vector<1x1024xf32>
    %8 = vector.shape_cast %7 : vector<1x1024xf32> to vector<1x1x1024xf32>
    %cst_5 = arith.constant dense<0.000000e+00> : vector<1xf32>
    %9 = vector.multi_reduction <add>, %8, %cst_5 [1, 2] : vector<1x1x1024xf32> to vector<1xf32>
    %10 = vector.shape_cast %9 : vector<1xf32> to vector<1x1x1xf32>
    %11 = vector.extract %10[0, 0, 0] : f32 from vector<1x1x1xf32>
    %12 = vector.broadcast %11 : f32 to vector<1x1x128xf32>
    %c0_6 = arith.constant 0 : index
    %c0_7 = arith.constant 0 : index
    %c0_8 = arith.constant 0 : index
    %13 = vector.load %arg4[%c0_6, %c0_7, %c0_8] : memref<1x1x128xf32, #tpu.memory_space<vmem>>, vector<1x1x128xf32>
    tpu.vector_store %arg4[%c0_6, %c0_7, %c0_8], %12 {strides = array<i32>} : memref<1x1x128xf32, #tpu.memory_space<vmem>>, vector<1x1x128xf32>,
    return
  }
  func.func @transform_0(%arg0: i32) -> (i32, i32) {
    %c0_i32 = arith.constant 0 : i32
    %c0_i32_0 = arith.constant 0 : i32
    return %arg0, %c0_i32 : i32, i32
  }
  func.func @transform_1(%arg0: i32) -> (i32, i32) {
    %c0_i32 = arith.constant 0 : i32
    %c0_i32_0 = arith.constant 0 : i32
    return %arg0, %c0_i32 : i32, i32
  }
  func.func @transform_2(%arg0: i32) -> (i32, i32) {
    %c0_i32 = arith.constant 0 : i32
    %c0_i32_0 = arith.constant 0 : i32
    %c0_i32_1 = arith.constant 0 : i32
    return %c0_i32, %c0_i32_0 : i32, i32
  }
  func.func @transform_3(%arg0: i32) -> (i32, i32, i32) {
    %c0_i32 = arith.constant 0 : i32
    %c0_i32_0 = arith.constant 0 : i32
    %c0_i32_1 = arith.constant 0 : i32
    return %arg0, %c0_i32, %c0_i32_0 : i32, i32, i32
  }
}

</mosaic_0001>

<llo_original>
// kernel: tpu_custom_call.1
$region0: #{tpu_custom_call.1}
  #allocation0 [shape = 'u32[]', space=smem, size = 0x4, offset = 0x4, fixed_abs, tag = 'smem constant byte address 0x4 - core index']
  #allocation1 [shape = 'u32[144,128]{1,0:T(1,128)}', space=vmem, size = 0x12000, scoped, tag = 'internal scratch']
  %s0 = inlined_call_operand.hbm [shape: f32[1,1024], index: 0, kind: input, shape index: {}]
  %s1 = inlined_call_operand.hbm [shape: f32[1,1024], index: 1, kind: input, shape index: {}]
  %s2 = inlined_call_operand.hbm [shape: f32[1,1024], index: 2, kind: input, shape index: {}]
  %s3 = inlined_call_operand.hbm [shape: f32[1,1,128], index: 3, kind: output, shape index: {}]
  %s4 = sld [smem:[#allocation0]]
  $region34: #{tpu_custom_call.1} parent=0
    _
  %s6 = ssub.s32 1, %s4
  %s7 = scalar_select 0, %s6, %s4
  $region1: #{tpu_custom_call.1} parent=0
    #allocation2 [shape = 'u8[4096]{0}', space=vmem, size = 0x1000, scoped, tag = 'input window, operand 0, single buffered']
    #allocation3 [shape = 's32[1]{0}', space=sflag, size = 0x4, scoped, tag = 'scoped memory for tpu_custom_call.1']
    #allocation4 [shape = 's32[1]{0}', space=sflag, size = 0x4, scoped, tag = 'scoped memory for tpu_custom_call.1']
    #allocation5 [shape = 'u8[4096]{0}', space=vmem, size = 0x1000, scoped, tag = 'input window, operand 1, single buffered']
    #allocation6 [shape = 's32[1]{0}', space=sflag, size = 0x4, scoped, tag = 'scoped memory for tpu_custom_call.1']
    #allocation7 [shape = 'u8[4096]{0}', space=vmem, size = 0x1000, scoped, tag = 'input window, operand 2, single buffered']
    #allocation8 [shape = 'u8[512]{0}', space=vmem, size = 0x400, scoped, tag = 'output window, operand 0, single buffered']
    %8 = vsyncpa [#allocation3], 0
    %9 = vsyncpa [#allocation6], 0
    %10 = vsyncpa [#allocation4], 0
    // Predicated region
    $region2: #{tpu_custom_call.1} parent=1 // pred_check
      _
    $region3: #{tpu_custom_call.1} parent=1 // pred_check_branch
      %12 = sbr.rel (0) target = $region5
    $region4: #{tpu_custom_call.1} parent=1 // pred_region
      %s14 = ssub.s32 128, 128
      %15 = vsyncadd [#allocation3], %s14
      %s17 = sshll.u32 [#allocation2], 4
      %s18 = int_to_ptr.vmem [resolvable:$true] %s17
      %20 = dma.hbm_to_vmem [thread:$0]  %s0, 128, %s18, [#allocation3]
    $region5: #{tpu_custom_call.1} parent=1 // pred_fallthru
      _
    // Predicated region
    $region6: #{tpu_custom_call.1} parent=1 // pred_check
      _
    $region7: #{tpu_custom_call.1} parent=1 // pred_check_branch
      %22 = sbr.rel (0) target = $region9
    $region8: #{tpu_custom_call.1} parent=1 // pred_region
      %s24 = ssub.s32 128, 128
      %25 = vsyncadd [#allocation6], %s24
      %s27 = sshll.u32 [#allocation5], 4
      %s28 = int_to_ptr.vmem [resolvable:$true] %s27
      %30 = dma.hbm_to_vmem [thread:$0]  %s1, 128, %s28, [#allocation6]
    $region9: #{tpu_custom_call.1} parent=1 // pred_fallthru
      _
    // Predicated region
    $region10: #{tpu_custom_call.1} parent=1 // pred_check
      _
    $region11: #{tpu_custom_call.1} parent=1 // pred_check_branch
      %32 = sbr.rel (0) target = $region13
    $region12: #{tpu_custom_call.1} parent=1 // pred_region
      %s34 = ssub.s32 128, 128
      %35 = vsyncadd [#allocation6], %s34
      %s37 = sshll.u32 [#allocation7], 4
      %s38 = int_to_ptr.vmem [resolvable:$true] %s37
      %40 = dma.hbm_to_vmem [thread:$0]  %s2, 128, %s38, [#allocation6]
    $region13: #{tpu_custom_call.1} parent=1 // pred_fallthru
      _
    // Predicated region
    $region14: #{tpu_custom_call.1} parent=1 // pred_check
      _
    $region15: #{tpu_custom_call.1} parent=1 // pred_check_branch
      %42 = sbr.rel (0) target = $region17
    $region16: #{tpu_custom_call.1} parent=1 // pred_region
      %43 = dma.done [#allocation3], 128
    $region17: #{tpu_custom_call.1} parent=1 // pred_fallthru
      _
    // Predicated region
    $region18: #{tpu_custom_call.1} parent=1 // pred_check
      _
    $region19: #{tpu_custom_call.1} parent=1 // pred_check_branch
      %45 = sbr.rel (0) target = $region21
    $region20: #{tpu_custom_call.1} parent=1 // pred_region
      %46 = dma.done [#allocation6], 128
    $region21: #{tpu_custom_call.1} parent=1 // pred_fallthru
      _
    // Predicated region
    $region22: #{tpu_custom_call.1} parent=1 // pred_check
      _
    $region23: #{tpu_custom_call.1} parent=1 // pred_check_branch
      %48 = sbr.rel (0) target = $region25
    $region24: #{tpu_custom_call.1} parent=1 // pred_region
      %49 = dma.done [#allocation6], 128
    $region25: #{tpu_custom_call.1} parent=1 // pred_fallthru
      _
    %v50 = vld [vmem:[#allocation2] sm:$0xff]
    %v51 = vld [vmem:[#allocation5] sm:$0xff]
    %v52 = vsub.f32 %v50, %v51
    %v53 = vmul.f32 %v52, %v52
    %v54 = vadd.f32 %v53, 0.0
    %v55 = vld [vmem:[#allocation7] sm:$0xff]
    %v56 = vmul.f32 %v54, %v55
    %v58 = vlaneseq
    %v59 = vshrl.u32 %v58, 7
    %v60 = vsub.s32 0, %v59
    %v61 = vrot.slane %v56, %v60
    %v62 = vlaneseq
    %v63 = vshrl.u32 %v62, 7
    %v64 = vsub.s32 1, %v63
    %v65 = vrot.slane %v56, %v64
    %v66 = vlaneseq
    %v67 = vshrl.u32 %v66, 7
    %v68 = vsub.s32 2, %v67
    %v69 = vrot.slane %v56, %v68
    %v70 = vlaneseq
    %v71 = vshrl.u32 %v70, 7
    %v72 = vsub.s32 3, %v71
    %v73 = vrot.slane %v56, %v72
    %v74 = vlaneseq
    %v75 = vshrl.u32 %v74, 7
    %v76 = vsub.s32 4, %v75
    %v77 = vrot.slane %v56, %v76
    %v78 = vlaneseq
    %v79 = vshrl.u32 %v78, 7
    %v80 = vsub.s32 5, %v79
    %v81 = vrot.slane %v56, %v80
    %v82 = vlaneseq
    %v83 = vshrl.u32 %v82, 7
    %v84 = vsub.s32 6, %v83
    %v85 = vrot.slane %v56, %v84
    %v86 = vlaneseq
    %v87 = vshrl.u32 %v86, 7
    %v88 = vsub.s32 7, %v87
    %v89 = vrot.slane %v56, %v88
    %vm98 = vcmask 1040384
    %v99 = vsel %vm98, %v61, 0.0
    %v100 = vsel %vm98, %v65, 0.0
    %v101 = vadd.f32 %v99, %v100
    %v102 = vsel %vm98, %v69, 0.0
    %v103 = vadd.f32 %v101, %v102
    %v104 = vsel %vm98, %v73, 0.0
    %v105 = vadd.f32 %v103, %v104
    %v106 = vsel %vm98, %v77, 0.0
    %v107 = vadd.f32 %v105, %v106
    %v108 = vsel %vm98, %v81, 0.0
    %v109 = vadd.f32 %v107, %v108
    %v110 = vsel %vm98, %v85, 0.0
    %v111 = vadd.f32 %v109, %v110
    %v112 = vsel %vm98, %v89, 0.0
    %v113 = vadd.f32 %v111, %v112
    %114 = vadd.xlane.f32.xlu0 %v113
    %v115 = vpop.xlane.xlu0 %114
    %v116 = vrot.slane %v115, 4
    %v117 = vadd.f32 %v115, %v116
    %v118 = vrot.slane %v117, 2
    %v119 = vadd.f32 %v117, %v118
    %v120 = vrot.slane %v119, 1
    %v121 = vadd.f32 %v119, %v120
    %s122 = vtos %v121
    %v123 = vstv %s122
    %124 = vst [vmem:[#allocation8] sm:$0x1] %v123
    // Predicated region
    $region26: #{tpu_custom_call.1} parent=1 // pred_check
      _
    $region27: #{tpu_custom_call.1} parent=1 // pred_check_branch
      %126 = sbr.rel (0) target = $region29
    $region28: #{tpu_custom_call.1} parent=1 // pred_region
      %s128 = ssub.s32 16, 16
      %129 = vsyncadd [#allocation4], %s128
      %s131 = sshll.u32 [#allocation8], 4
      %s132 = int_to_ptr.vmem [resolvable:$true] %s131
      %134 = dma.vmem_to_hbm [thread:$0]  %s132, 16, %s3, [#allocation4]
    $region29: #{tpu_custom_call.1} parent=1 // pred_fallthru
      _
    // Predicated region
    $region30: #{tpu_custom_call.1} parent=1 // pred_check
      _
    $region31: #{tpu_custom_call.1} parent=1 // pred_check_branch
      %136 = sbr.rel (0) target = $region33
    $region32: #{tpu_custom_call.1} parent=1 // pred_region
      %137 = dma.done [#allocation4], 16
    $region33: #{tpu_custom_call.1} parent=1 // pred_fallthru
      _
    %138 = vsyncpa [#allocation3], 1
    %139 = vsyncpa [#allocation6], 1
    %140 = vsyncpa [#allocation4], 1

</llo_original>
